<compile_context>
chip_gen: v7x
topology: tpu7x:2x2x1
jax: 0.10.0
libtpu: 0.0.40
codegen_flags: <defaults>
</compile_context>

<pallas_src>
from functools import partial

import numpy as np
import jax
import jax.numpy as jnp
from jax.experimental import pallas as pl
from jax.experimental.pallas import tpu as pltpu  # noqa: F401  (kept for TPU backend selection / parity)


def _identity_alias_kernel(x_hbm, o_hbm):
    # Output is aliased to the input (input_output_aliases={0: 0}), so there is
    # nothing to compute and nothing to move: intentional no-op body.
    del x_hbm, o_hbm


def _identity_pallas(x: jnp.ndarray) -> jnp.ndarray:
    return pl.pallas_call(
        _identity_alias_kernel,
        out_shape=jax.ShapeDtypeStruct(x.shape, x.dtype),
        in_specs=[pl.BlockSpec(memory_space=pl.ANY)],   # raw HBM ref, no auto-DMA
        out_specs=pl.BlockSpec(memory_space=pl.ANY),    # raw HBM ref, no auto-DMA
        input_output_aliases={0: 0},                    # output buffer == input buffer
    )(x)


@partial(jax.jit, donate_argnums=(0,))
def test_model_forward(inputs: jnp.ndarray, targets: jnp.ndarray):
    """JAX/Pallas equivalent of TestModel.forward.

    Returns (inputs, {'loss': 0}). The Pallas call aliases its output to the
    (donated) input, so the forward moves zero bytes of tensor data.
    """
    del targets  # unused, as in the original module
    out = _identity_pallas(inputs)
    return out, {"loss": jnp.int32(0)}


if __name__ == "__main__":
    key = jax.random.PRNGKey(0)
    k_in, k_tgt = jax.random.split(key)

    # Small NCHW-style input and a matching (unused) target tensor.
    inputs = jax.random.normal(k_in, (2, 4, 16, 16), dtype=jnp.float32)
    targets = jax.random.randint(k_tgt, (2, 16, 16), 0, 4, dtype=jnp.int32)

    # `inputs` is donated to the jitted forward, so snapshot the expected
    # values on the host before calling.
    expected = np.asarray(jax.device_get(inputs))
    expected_shape = inputs.shape
    expected_dtype = inputs.dtype

    out, aux = test_model_forward(inputs, targets)
    out = jax.block_until_ready(out)

    assert out.shape == expected_shape
    assert out.dtype == expected_dtype
    assert np.array_equal(np.asarray(jax.device_get(out)), expected)
    assert int(aux["loss"]) == 0

    print("KERNEL_OK")
</pallas_src>

<mosaic_0001>
module attributes {stable_mosaic.version = 11 : i64} {
  func.func @_identity_alias_kernel(%arg0: memref<2x4x16x16xf32, #tpu.memory_space<any>>, %arg1: memref<2x4x16x16xf32, #tpu.memory_space<any>>) attributes {dimension_semantics = [], scalar_prefetch = 0 : i64, scratch_operands = 0 : i64, tpu.core_type = #tpu.core_type<tc>} {
    return
  }
}

</mosaic_0001>

<llo_original>
// kernel: test_model_forward.1
$region0: #{test_model_forward.1}
  #allocation0 [shape = 'u32[]', space=smem, size = 0x4, offset = 0x4, fixed_abs, tag = 'smem constant byte address 0x4 - core index']
  #allocation1 [shape = 'u32[144,128]{1,0:T(1,128)}', space=vmem, size = 0x12000, scoped, tag = 'internal scratch']
  %s0 = inlined_call_operand.hbm [shape: f32[2,4,16,16], index: 0, kind: input, shape index: {}, may-alias: {0,1}]
  %s1 = inlined_call_operand.hbm [shape: f32[2,4,16,16], index: 1, kind: output, shape index: {}, may-alias: {0,1}]
  %s2 = sld [smem:[#allocation0]]
  $region2: #{test_model_forward.1} parent=0
    _
  %s4 = ssub.s32 1, %s2
  %s5 = scalar_select 0, %s4, %s2

</llo_original>
